<compile_context>
chip_gen: v6e
topology: v6e:2x2x1
jax: 0.10.0
libtpu: 0.0.40
codegen_flags: <defaults>
</compile_context>

<pallas_src>
import jax
import jax.numpy as jnp
from jax.experimental import pallas as pl
from jax.experimental.pallas import tpu as pltpu

# Target point of f: x = [5, 0, 1] — compile-time constants, not a kernel input.
_TARGET = (5.0, 0.0, 1.0)


def _f_kernel(pars_ref, out_ref):
    # Scalar-path kernel: 3 subs, 3 muls, 2 adds on SMEM refs.
    # pars_ref: SMEM f32[3], out_ref: SMEM f32[1].
    d0 = pars_ref[0] - _TARGET[0]
    d1 = pars_ref[1] - _TARGET[1]
    d2 = pars_ref[2] - _TARGET[2]
    out_ref[0] = d0 * d0 + d1 * d1 + d2 * d2


_f_call = pl.pallas_call(
    _f_kernel,
    out_shape=jax.ShapeDtypeStruct((1,), jnp.float32),
    in_specs=[pl.BlockSpec(memory_space=pltpu.MemorySpace.SMEM)],
    out_specs=pl.BlockSpec(memory_space=pltpu.MemorySpec.SMEM)
    if hasattr(pltpu, "MemorySpec")
    else pl.BlockSpec(memory_space=pltpu.MemorySpace.SMEM),
)


@jax.jit
def net_forward(pars, _x=None):
    """Pallas equivalent of Net.forward: returns scalar f(pars). Input `_x` is ignored."""
    # Shape/dtype contract is enforced at trace time; keeping pars f32 at the
    # call site means no convert HLO is emitted inside this jit.
    assert pars.shape == (3,), "Net.f requires exactly 3 parameters"
    assert pars.dtype == jnp.float32, "pass f32 parameters (cast at creation time)"
    out = _f_call(pars)          # f32[1] in SMEM -> single tiny output buffer
    return out[0]                # scalar, matching Net.forward semantics


if __name__ == "__main__":
    key = jax.random.PRNGKey(0)
    k_pars, k_in = jax.random.split(key)
    # Parameter x passed to Net.__init__: a 3-vector, as implied by f().
    pars = jax.random.normal(k_pars, (3,), dtype=jnp.float32)
    # Dummy forward input (ignored by the module).
    dummy = jax.random.normal(k_in, (2, 4), dtype=jnp.float32)

    result = jax.block_until_ready(net_forward(pars, dummy))

    # Reference check in plain JAX.
    ref = (pars[0] - 5.0) ** 2 + pars[1] ** 2 + (pars[2] - 1.0) ** 2
    assert jnp.allclose(result, ref, rtol=1e-6, atol=1e-6), (result, ref)
    print("KERNEL_OK")
</pallas_src>

<mosaic_0001>
module attributes {stable_mosaic.version = 11 : i64} {
  func.func @_f_kernel(%arg0: memref<3xf32, #tpu.memory_space<smem>>, %arg1: memref<1xf32, #tpu.memory_space<smem>>) attributes {dimension_semantics = [], scalar_prefetch = 0 : i64, scratch_operands = 0 : i64, tpu.core_type = #tpu.core_type<tc>} {
    %c0 = arith.constant 0 : index
    %0 = memref.load %arg0[%c0] : memref<3xf32, #tpu.memory_space<smem>>
    %cst = arith.constant 5.000000e+00 : f32
    %1 = arith.subf %0, %cst : f32
    %c1 = arith.constant 1 : index
    %2 = memref.load %arg0[%c1] : memref<3xf32, #tpu.memory_space<smem>>
    %cst_0 = arith.constant 0.000000e+00 : f32
    %3 = arith.subf %2, %cst_0 : f32
    %c2 = arith.constant 2 : index
    %4 = memref.load %arg0[%c2] : memref<3xf32, #tpu.memory_space<smem>>
    %cst_1 = arith.constant 1.000000e+00 : f32
    %5 = arith.subf %4, %cst_1 : f32
    %6 = arith.mulf %1, %1 : f32
    %7 = arith.mulf %3, %3 : f32
    %8 = arith.addf %6, %7 : f32
    %9 = arith.mulf %5, %5 : f32
    %10 = arith.addf %8, %9 : f32
    %c0_2 = arith.constant 0 : index
    %11 = memref.load %arg1[%c0_2] : memref<1xf32, #tpu.memory_space<smem>>
    memref.store %10, %arg1[%c0_2] : memref<1xf32, #tpu.memory_space<smem>>
    return
  }
}

</mosaic_0001>

<llo_original>
// kernel: net_forward.1
$region0: #{net_forward.1}
  #allocation0 [shape = 'u32[]', space=smem, size = 0x4, offset = 0x4, fixed_abs, tag = 'smem constant byte address 0x4 - core index']
  #allocation1 [shape = 'u32[144,128]{1,0:T(1,128)}', space=vmem, size = 0x12000, scoped, tag = 'internal scratch']
  %s0 = inlined_call_operand.hbm [shape: f32[3], index: 0, kind: input, shape index: {}]
  %s1 = inlined_call_operand.hbm [shape: f32[1], index: 1, kind: output, shape index: {}]
  %s2 = sld [smem:[#allocation0]]
  $region18: #{net_forward.1} parent=0
    _
  %s4 = ssub.s32 1, %s2
  %s5 = scalar_select 0, %s4, %s2
  $region1: #{net_forward.1} parent=0
    #allocation2 [shape = 'u8[512]{0}', space=smem, size = 0x200, scoped, tag = 'input window, operand 0, single buffered']
    #allocation3 [shape = 's32[1]{0}', space=sflag, size = 0x4, scoped, tag = 'scoped memory for net_forward.1']
    #allocation4 [shape = 's32[1]{0}', space=sflag, size = 0x4, scoped, tag = 'scoped memory for net_forward.1']
    #allocation5 [shape = 'u8[512]{0}', space=smem, size = 0x200, scoped, tag = 'output window, operand 0, single buffered']
    %6 = vsyncpa [#allocation3], 0
    %7 = vsyncpa [#allocation4], 0
    // Predicated region
    $region2: #{net_forward.1} parent=1 // pred_check
      _
    $region3: #{net_forward.1} parent=1 // pred_check_branch
      %9 = sbr.rel (0) target = $region5
    $region4: #{net_forward.1} parent=1 // pred_region
      %s11 = ssub.s32 16, 16
      %12 = vsyncadd [#allocation3], %s11
      %15 = dma.hbm_to_smem %s0, 16, [#allocation2], [#allocation3]
    $region5: #{net_forward.1} parent=1 // pred_fallthru
      _
    // Predicated region
    $region6: #{net_forward.1} parent=1 // pred_check
      _
    $region7: #{net_forward.1} parent=1 // pred_check_branch
      %17 = sbr.rel (0) target = $region9
    $region8: #{net_forward.1} parent=1 // pred_region
      %18 = dma.done [#allocation3], 16
    $region9: #{net_forward.1} parent=1 // pred_fallthru
      _
    %19 = sfence
    %s20 = sld [smem:[#allocation2]]
    %s21 = ssub.f32 %s20, 5.0
    %s22 = sld [smem:[#allocation2 + $0x1]]
    %s23 = sld [smem:[#allocation2 + $0x2]]
    %s24 = ssub.f32 %s23, 1.0
    %s25 = smul.f32 %s21, %s21
    %s26 = smul.f32 %s22, %s22
    %s27 = sadd.f32 %s25, %s26
    %s28 = smul.f32 %s24, %s24
    %s29 = sadd.f32 %s27, %s28
    %s30 = scalar_lea.smem [#allocation5], 0
    %31 = sst [smem:[%s30]] %s29
    // Predicated region
    $region10: #{net_forward.1} parent=1 // pred_check
      _
    $region11: #{net_forward.1} parent=1 // pred_check_branch
      %33 = sbr.rel (0) target = $region13
    $region12: #{net_forward.1} parent=1 // pred_region
      %s35 = ssub.s32 16, 16
      %36 = vsyncadd [#allocation4], %s35
      %39 = dma.smem_to_hbm [#allocation5], 16, %s1, [#allocation4]
    $region13: #{net_forward.1} parent=1 // pred_fallthru
      _
    // Predicated region
    $region14: #{net_forward.1} parent=1 // pred_check
      _
    $region15: #{net_forward.1} parent=1 // pred_check_branch
      %41 = sbr.rel (0) target = $region17
    $region16: #{net_forward.1} parent=1 // pred_region
      %42 = dma.done [#allocation4], 16
    $region17: #{net_forward.1} parent=1 // pred_fallthru
      _
    %43 = sfence
    %44 = vsyncpa [#allocation3], 1
    %45 = vsyncpa [#allocation4], 1

</llo_original>
